<compile_context>
chip_gen: v6e
topology: v6e:2x2x1
jax: 0.10.0
libtpu: 0.0.40
codegen_flags: <defaults>
</compile_context>

<pallas_src>
import functools
import re

import jax
import jax.numpy as jnp
from jax.experimental import pallas as pl
from jax.experimental.pallas import tpu as pltpu

_MiB = 1024 * 1024
_MAX_LANE_TILE = 2048   # lane tiles beyond ~1-2K give <1-2% extra HBM utilization


def _round_up(x, m):
    return -(-x // m) * m


def _cdiv(a, b):
    return -(-a // b)


def _tpu_vmem_and_generation():
    """Best-effort query of per-core VMEM capacity and chip generation (None on failure)."""
    vmem_bytes = None
    try:
        vmem_bytes = int(pltpu.get_tpu_info().vmem_capacity_bytes)
    except Exception:
        vmem_bytes = None
    gen = None
    try:
        kind = jax.devices()[0].device_kind.lower()   # e.g. "TPU v5 lite", "TPU v6e", "TPU7x"
        m = re.search(r"(\d+)", kind)
        if m:
            gen = int(m.group(1))
    except Exception:
        gen = None
    return vmem_bytes, gen


def _pick_budgets(vmem_bytes):
    """(scoped vmem limit, block budget for double-buffered blocks + temporaries)."""
    if vmem_bytes is None:
        return 48 * _MiB, 36 * _MiB          # conservative: safe on every generation
    if vmem_bytes >= 96 * _MiB:
        return 96 * _MiB, 72 * _MiB          # v5e / v6e: 128 MiB physical VMEM per core
    return 56 * _MiB, 44 * _MiB              # v7x: 64 MiB physical VMEM per core


def _per_lane_bytes(C, in_itemsize, out_itemsize, n_f32_temps):
    """VMEM bytes per (one batch row, one allocated lane column) of a block."""
    def cpad(itemsize):
        # sub-32-bit dtypes pack along sublanes: 8 rows/f32, 16/bf16, 32/int8-fp8
        return _round_up(C, 8 * max(1, 4 // itemsize))
    b = 2 * cpad(in_itemsize) * in_itemsize        # double-buffered input block
    b += 2 * cpad(out_itemsize) * out_itemsize     # double-buffered output block
    b += n_f32_temps * _round_up(C, 8) * 4         # full-size f32 temporaries inside the kernel
    return b


def _select_tiles(N, C, HW, in_itemsize, out_itemsize, block_budget, n_f32_temps, min_grid_steps):
    """Pick (TN, TW) so blocks fit the VMEM budget; guarantee >= min_grid_steps grid steps."""
    per_lane = _per_lane_bytes(C, in_itemsize, out_itemsize, n_f32_temps)
    if per_lane * 128 > block_budget:
        # TODO(synk): tile the channel axis for extreme C; never hit for SAM-style shapes.
        raise NotImplementedError(
            f"LayerNorm2d Pallas kernel: C={C} too large for the VMEM block budget "
            f"({per_lane * 128} > {block_budget} bytes); C-tiling not implemented.")

    # Lane (spatial) tile: widest multiple of 128 that fits a single-batch block, capped.
    tw_cap = min(_MAX_LANE_TILE, (block_budget // per_lane) // 128 * 128)
    tw_cap = max(128, tw_cap)

    hw_alloc = _round_up(HW, 128)
    if HW <= 128:
        TW = HW                                   # sub-128 spatial: full extent (masked stores)
    elif HW % 128 == 0 and HW <= tw_cap:
        TW = HW
    else:
        TW = min(tw_cap, hw_alloc)                # multiple of 128; cdiv grid pads the last tile
    tw_alloc = _round_up(TW, 128)

    # Batch tile: fold as many images per block as the remaining budget allows.
    TN = max(1, min(N, block_budget // (per_lane * tw_alloc)))

    # Megacore guard (v7x: 2 TensorCores/chip). Keep at least `min_grid_steps` grid steps so
    # the "parallel" dimension_semantics can shard work across both cores.
    while _cdiv(N, TN) * _cdiv(HW, TW) < min_grid_steps:
        if TN > 1:
            TN = (TN + 1) // 2
        elif TW > 128 and HW > 128:
            TW = max(128, _round_up(TW // 2, 128))
        else:
            break
    return TN, TW


def _ln2d_kernel(eps, inv_c, affine_low_precision, x_ref, w_ref, b_ref, o_ref):
    # x_ref / o_ref block: (TN, C, TW); w_ref / b_ref: (C, 1)
    x = x_ref[...].astype(jnp.float32)                         # f32 statistics regardless of dtype
    mu = jnp.sum(x, axis=1, keepdims=True) * inv_c              # mean over channels
    # Streaming variance: no named full-block centered copy kept live across passes.
    var = jnp.sum(jnp.square(x - mu), axis=1, keepdims=True) * inv_c
    inv_std = jax.lax.rsqrt(var + eps)

    if affine_low_precision:
        # bf16 final pass (only enabled on chips with a bf16 VPU, i.e. v6e / v7x):
        # statistics stay in f32, normalize + affine run in the I/O dtype (half vreg traffic,
        # one fewer full-size f32 temporary).
        cd = o_ref.dtype
        xn = (x_ref[...] - mu.astype(cd)) * inv_std.astype(cd)
        w = w_ref[...].astype(cd)[None, :, :]                   # (1, C, 1)
        b = b_ref[...].astype(cd)[None, :, :]
        o_ref[...] = xn * w + b
    else:
        w = w_ref[...].astype(jnp.float32)[None, :, :]          # (1, C, 1)
        b = b_ref[...].astype(jnp.float32)[None, :, :]
        o_ref[...] = ((x - mu) * inv_std * w + b).astype(o_ref.dtype)


def layer_norm_2d(x, weight, bias, eps=1e-6):
    """x: (N, C, H, W); weight/bias: (C,). Returns (N, C, H, W)."""
    N, C, H, W = x.shape
    HW = H * W

    vmem_limit, block_budget = _pick_budgets(_tpu_vmem_and_generation()[0])
    vmem_bytes, gen = _tpu_vmem_and_generation()
    vmem_limit, block_budget = _pick_budgets(vmem_bytes)

    two_tc = gen is not None and gen >= 7                        # v7x: 2 TensorCores per chip
    has_bf16_vpu = gen is not None and gen >= 6                  # v5e has no bf16 VPU/EUP
    affine_low = bool(has_bf16_vpu and x.dtype == jnp.bfloat16)

    itemsize = jnp.dtype(x.dtype).itemsize
    # With the streaming-variance form: ~2 full-size f32 arrays live (upcast x + pre-cast
    # result) for the f32 final path, ~2 for f32 inputs, 3 if a non-f32 input still takes
    # the f32 final path (upcast x, normalized f32, pre-cast result).
    n_f32_temps = 2 if (x.dtype == jnp.float32 or affine_low) else 3
    min_grid_steps = 2 if two_tc else 1

    TN, TW = _select_tiles(N, C, HW, itemsize, itemsize, block_budget,
                           n_f32_temps, min_grid_steps)

    x_flat = x.reshape(N, C, HW)
    w2 = weight.reshape(C, 1)
    b2 = bias.reshape(C, 1)

    kernel = functools.partial(_ln2d_kernel, float(eps), 1.0 / C, affine_low)

    cost = pl.CostEstimate(
        flops=7 * N * C * HW,                                   # sub/sq/sum x2, normalize, affine
        transcendentals=N * HW,                                 # one rsqrt per (n, spatial) column
        bytes_accessed=2 * N * C * HW * itemsize + 2 * C * 4,   # read x + write y + params
    )

    out = pl.pallas_call(
        kernel,
        out_shape=jax.ShapeDtypeStruct((N, C, HW), x.dtype),
        grid_spec=pltpu.PrefetchScalarGridSpec(
            num_scalar_prefetch=0,
            grid=(pl.cdiv(N, TN), pl.cdiv(HW, TW)),
            in_specs=[
                pl.BlockSpec((TN, C, TW), lambda n, s: (n, 0, s)),
                pl.BlockSpec((C, 1), lambda n, s: (0, 0)),
                pl.BlockSpec((C, 1), lambda n, s: (0, 0)),
            ],
            out_specs=pl.BlockSpec((TN, C, TW), lambda n, s: (n, 0, s)),
        ),
        compiler_params=pltpu.CompilerParams(
            dimension_semantics=("parallel", "parallel"),       # independent axes -> megacore
            vmem_limit_bytes=vmem_limit,
        ),
        cost_estimate=cost,
    )(x_flat, w2, b2)

    return out.reshape(N, C, H, W)


def reference_layer_norm_2d(x, weight, bias, eps=1e-6):
    x = x.astype(jnp.float32)
    u = x.mean(axis=1, keepdims=True)
    s = ((x - u) ** 2).mean(axis=1, keepdims=True)
    xn = (x - u) / jnp.sqrt(s + eps)
    w = weight.astype(jnp.float32)
    b = bias.astype(jnp.float32)
    return w[None, :, None, None] * xn + b[None, :, None, None]


def _check(x, w, b, eps=1e-6, atol=1e-5, rtol=1e-5):
    out = jax.block_until_ready(layer_norm_2d(x, w, b, eps=eps))
    ref = reference_layer_norm_2d(x, w, b, eps=eps)
    assert out.shape == x.shape and out.dtype == x.dtype
    assert jnp.allclose(out.astype(jnp.float32), ref, atol=atol, rtol=rtol), "mismatch vs reference"


if __name__ == "__main__":
    # Case 1: canonical small module shape; default (ones/zeros) affine params.
    key = jax.random.PRNGKey(0)
    N, C, H, W = 2, 4, 16, 16
    x = jax.random.normal(key, (N, C, H, W), dtype=jnp.float32)
    weight = jnp.ones((C,), dtype=jnp.float32)
    bias = jnp.zeros((C,), dtype=jnp.float32)
    _check(x, weight, bias)

    # Case 2: non-128-multiple spatial extent (HW = 65*65 = 4225) -> padded last lane tile,
    # non-trivial affine params.
    ka, kb, kc = jax.random.split(jax.random.PRNGKey(0), 3)
    N2, C2, H2, W2 = 2, 8, 65, 65
    x2 = jax.random.normal(ka, (N2, C2, H2, W2), dtype=jnp.float32)
    w2 = jax.random.normal(kb, (C2,), dtype=jnp.float32)
    b2 = jax.random.normal(kc, (C2,), dtype=jnp.float32)
    _check(x2, w2, b2)

    # Case 3: small, non-aligned HW (< 128) and odd channel count (full-extent blocks).
    k3 = jax.random.PRNGKey(0)
    N3, C3, H3, W3 = 3, 6, 7, 9
    x3 = jax.random.normal(k3, (N3, C3, H3, W3), dtype=jnp.float32)
    _check(x3, jnp.ones((C3,), jnp.float32), jnp.zeros((C3,), jnp.float32))

    # Case 4: bf16 input — exercises the low-precision final pass on v6e/v7x and the
    # f32 final path (with dtype-aware VMEM accounting) on v5e / unknown chips.
    kd, ke, kf = jax.random.split(jax.random.PRNGKey(0), 3)
    N4, C4, H4, W4 = 2, 8, 32, 32
    x4 = jax.random.normal(kd, (N4, C4, H4, W4), dtype=jnp.float32).astype(jnp.bfloat16)
    w4 = jax.random.normal(ke, (C4,), dtype=jnp.float32).astype(jnp.bfloat16)
    b4 = jax.random.normal(kf, (C4,), dtype=jnp.float32).astype(jnp.bfloat16)
    _check(x4, w4, b4, atol=0.06, rtol=0.05)

    print("KERNEL_OK")
</pallas_src>

<mosaic_0001>
module attributes {stable_mosaic.version = 11 : i64} {
  func.func @_ln2d_kernel(%arg0: i32, %arg1: i32, %arg2: memref<2x4x256xf32, #tpu.memory_space<vmem>>, %arg3: memref<4x1xf32, #tpu.memory_space<vmem>>, %arg4: memref<4x1xf32, #tpu.memory_space<vmem>>, %arg5: memref<2x4x256xf32, #tpu.memory_space<vmem>>) attributes {dimension_semantics = [#tpu.dimension_semantics<parallel>, #tpu.dimension_semantics<parallel>], iteration_bounds = array<i64: 1, 1>, scalar_prefetch = 0 : i64, scratch_operands = 0 : i64, tpu.core_type = #tpu.core_type<tc>, window_params = [{transform_indices = @transform_0, window_bounds = array<i64: 2, 4, 256>}, {pipeline_mode = #tpu.pipeline_mode<synchronous>, transform_indices = @transform_1, window_bounds = array<i64: 4, 1>}, {pipeline_mode = #tpu.pipeline_mode<synchronous>, transform_indices = @transform_2, window_bounds = array<i64: 4, 1>}, {transform_indices = @transform_3, window_bounds = array<i64: 2, 4, 256>}]} {
    %c0 = arith.constant 0 : index
    %c0_0 = arith.constant 0 : index
    %c0_1 = arith.constant 0 : index
    %0 = vector.load %arg2[%c0, %c0_0, %c0_1] : memref<2x4x256xf32, #tpu.memory_space<vmem>>, vector<2x4x256xf32>
    %cst = arith.constant dense<0.000000e+00> : vector<2x256xf32>
    %1 = vector.multi_reduction <add>, %0, %cst [1] : vector<2x4x256xf32> to vector<2x256xf32>
    %2 = vector.shape_cast %1 : vector<2x256xf32> to vector<2x1x256xf32>
    %cst_2 = arith.constant 2.500000e-01 : f32
    %3 = vector.broadcast %cst_2 : f32 to vector<2x1x256xf32>
    %4 = arith.mulf %2, %3 : vector<2x1x256xf32>
    %5 = vector.broadcast %4 : vector<2x1x256xf32> to vector<2x4x256xf32>
    %6 = arith.subf %0, %5 : vector<2x4x256xf32>
    %7 = arith.mulf %6, %6 : vector<2x4x256xf32>
    %cst_3 = arith.constant dense<0.000000e+00> : vector<2x256xf32>
    %8 = vector.multi_reduction <add>, %7, %cst_3 [1] : vector<2x4x256xf32> to vector<2x256xf32>
    %9 = vector.shape_cast %8 : vector<2x256xf32> to vector<2x1x256xf32>
    %cst_4 = arith.constant 2.500000e-01 : f32
    %10 = vector.broadcast %cst_4 : f32 to vector<2x1x256xf32>
    %11 = arith.mulf %9, %10 : vector<2x1x256xf32>
    %cst_5 = arith.constant 9.99999997E-7 : f32
    %12 = vector.broadcast %cst_5 : f32 to vector<2x1x256xf32>
    %13 = arith.addf %11, %12 : vector<2x1x256xf32>
    %14 = math.rsqrt %13 : vector<2x1x256xf32>
    %c0_6 = arith.constant 0 : index
    %c0_7 = arith.constant 0 : index
    %15 = vector.load %arg3[%c0_6, %c0_7] : memref<4x1xf32, #tpu.memory_space<vmem>>, vector<4x1xf32>
    %16 = vector.shape_cast %15 : vector<4x1xf32> to vector<1x4x1xf32>
    %c0_8 = arith.constant 0 : index
    %c0_9 = arith.constant 0 : index
    %17 = vector.load %arg4[%c0_8, %c0_9] : memref<4x1xf32, #tpu.memory_space<vmem>>, vector<4x1xf32>
    %18 = vector.shape_cast %17 : vector<4x1xf32> to vector<1x4x1xf32>
    %19 = vector.broadcast %4 : vector<2x1x256xf32> to vector<2x4x256xf32>
    %20 = arith.subf %0, %19 : vector<2x4x256xf32>
    %21 = vector.broadcast %14 : vector<2x1x256xf32> to vector<2x4x256xf32>
    %22 = arith.mulf %20, %21 : vector<2x4x256xf32>
    %23 = vector.broadcast %16 : vector<1x4x1xf32> to vector<2x4x256xf32>
    %24 = arith.mulf %22, %23 : vector<2x4x256xf32>
    %25 = vector.broadcast %18 : vector<1x4x1xf32> to vector<2x4x256xf32>
    %26 = arith.addf %24, %25 : vector<2x4x256xf32>
    %c0_10 = arith.constant 0 : index
    %c0_11 = arith.constant 0 : index
    %c0_12 = arith.constant 0 : index
    %27 = vector.load %arg5[%c0_10, %c0_11, %c0_12] : memref<2x4x256xf32, #tpu.memory_space<vmem>>, vector<2x4x256xf32>
    tpu.vector_store %arg5[%c0_10, %c0_11, %c0_12], %26 {strides = array<i32>} : memref<2x4x256xf32, #tpu.memory_space<vmem>>, vector<2x4x256xf32>,
    return
  }
  func.func @transform_0(%arg0: i32, %arg1: i32) -> (i32, i32, i32) {
    %c0_i32 = arith.constant 0 : i32
    %c0_i32_0 = arith.constant 0 : i32
    return %arg0, %c0_i32, %arg1 : i32, i32, i32
  }
  func.func @transform_1(%arg0: i32, %arg1: i32) -> (i32, i32) {
    %c0_i32 = arith.constant 0 : i32
    %c0_i32_0 = arith.constant 0 : i32
    %c0_i32_1 = arith.constant 0 : i32
    return %c0_i32, %c0_i32_0 : i32, i32
  }
  func.func @transform_2(%arg0: i32, %arg1: i32) -> (i32, i32) {
    %c0_i32 = arith.constant 0 : i32
    %c0_i32_0 = arith.constant 0 : i32
    %c0_i32_1 = arith.constant 0 : i32
    return %c0_i32, %c0_i32_0 : i32, i32
  }
  func.func @transform_3(%arg0: i32, %arg1: i32) -> (i32, i32, i32) {
    %c0_i32 = arith.constant 0 : i32
    %c0_i32_0 = arith.constant 0 : i32
    return %arg0, %c0_i32, %arg1 : i32, i32, i32
  }
}

</mosaic_0001>

<llo_original>
// kernel: tpu_custom_call.1
$region0: #{tpu_custom_call.1}
  #allocation0 [shape = 'u32[]', space=smem, size = 0x4, offset = 0x4, fixed_abs, tag = 'smem constant byte address 0x4 - core index']
  #allocation1 [shape = 'u32[144,128]{1,0:T(1,128)}', space=vmem, size = 0x12000, scoped, tag = 'internal scratch']
  %s0 = inlined_call_operand.hbm [shape: f32[2,4,256], index: 0, kind: input, shape index: {}]
  %s1 = inlined_call_operand.vmem [shape: f32[4,1], index: 1, kind: input, shape index: {}]
  %s2 = inlined_call_operand.vmem [shape: f32[4,1], index: 2, kind: input, shape index: {}]
  %s3 = inlined_call_operand.hbm [shape: f32[2,4,256], index: 3, kind: output, shape index: {}]
  %s4 = sld [smem:[#allocation0]]
  $region26: #{tpu_custom_call.1} parent=0
    _
  %s6 = ssub.s32 1, %s4
  %s7 = scalar_select 0, %s6, %s4
  $region1: #{tpu_custom_call.1} parent=0
    #allocation2 [shape = 'u8[8192]{0}', space=vmem, size = 0x2000, scoped, tag = 'input window, operand 0, single buffered']
    #allocation3 [shape = 's32[1]{0}', space=sflag, size = 0x4, scoped, tag = 'scoped memory for tpu_custom_call.1']
    #allocation4 [shape = 's32[1]{0}', space=sflag, size = 0x4, scoped, tag = 'scoped memory for tpu_custom_call.1']
    #allocation5 [shape = 'u8[8192]{0}', space=vmem, size = 0x2000, scoped, tag = 'output window, operand 0, single buffered']
    %8 = vsyncpa [#allocation3], 0
    %9 = vsyncpa [#allocation4], 0
    // Predicated region
    $region2: #{tpu_custom_call.1} parent=1 // pred_check
      _
    $region3: #{tpu_custom_call.1} parent=1 // pred_check_branch
      %11 = sbr.rel (0) target = $region5
    $region4: #{tpu_custom_call.1} parent=1 // pred_region
      %s13 = ssub.s32 256, 256
      %14 = vsyncadd [#allocation3], %s13
      %s15 = sshll.u32 [#allocation2], 4
      %s16 = int_to_ptr.vmem [resolvable:$true] %s15
      %21 = dma.hbm_to_vmem [thread:$0]  %s0, 256, %s16, [#allocation3], 128, 128, 8
    $region5: #{tpu_custom_call.1} parent=1 // pred_fallthru
      _
    // Predicated region
    $region6: #{tpu_custom_call.1} parent=1 // pred_check
      _
    $region7: #{tpu_custom_call.1} parent=1 // pred_check_branch
      %23 = sbr.rel (0) target = $region9
    $region8: #{tpu_custom_call.1} parent=1 // pred_region
      _
    $region9: #{tpu_custom_call.1} parent=1 // pred_fallthru
      _
    // Predicated region
    $region10: #{tpu_custom_call.1} parent=1 // pred_check
      _
    $region11: #{tpu_custom_call.1} parent=1 // pred_check_branch
      %25 = sbr.rel (0) target = $region13
    $region12: #{tpu_custom_call.1} parent=1 // pred_region
      _
    $region13: #{tpu_custom_call.1} parent=1 // pred_fallthru
      _
    // Predicated region
    $region14: #{tpu_custom_call.1} parent=1 // pred_check
      _
    $region15: #{tpu_custom_call.1} parent=1 // pred_check_branch
      %27 = sbr.rel (0) target = $region17
    $region16: #{tpu_custom_call.1} parent=1 // pred_region
      %28 = dma.done [#allocation3], 256
    $region17: #{tpu_custom_call.1} parent=1 // pred_fallthru
      _
    %v29 = vld [vmem:[#allocation2] sm:$0xff]
    %v30 = vld [vmem:[#allocation2 + $0x8] sm:$0xff]
    %v33 = vcombine.high %v29, %v29
    %v34 = vcombine.high %v30, %v30
    %vm37 = vcmask 1043456
    %v38 = vsel %vm37, %v29, 0.0
    %v39 = vrot.slane %v38, 4
    %v40 = vadd.f32 %v38, %v39
    %v41 = vrot.slane %v40, 2
    %v42 = vadd.f32 %v40, %v41
    %v43 = vrot.slane %v42, 1
    %v44 = vadd.f32 %v42, %v43
    %v45 = vsel %vm37, %v33, 0.0
    %v46 = vrot.slane %v45, 4
    %v47 = vadd.f32 %v45, %v46
    %v48 = vrot.slane %v47, 2
    %v49 = vadd.f32 %v47, %v48
    %v50 = vrot.slane %v49, 1
    %v51 = vadd.f32 %v49, %v50
    %v52 = vsel %vm37, %v30, 0.0
    %v53 = vrot.slane %v52, 4
    %v54 = vadd.f32 %v52, %v53
    %v55 = vrot.slane %v54, 2
    %v56 = vadd.f32 %v54, %v55
    %v57 = vrot.slane %v56, 1
    %v58 = vadd.f32 %v56, %v57
    %v59 = vsel %vm37, %v34, 0.0
    %v60 = vrot.slane %v59, 4
    %v61 = vadd.f32 %v59, %v60
    %v62 = vrot.slane %v61, 2
    %v63 = vadd.f32 %v61, %v62
    %v64 = vrot.slane %v63, 1
    %v65 = vadd.f32 %v63, %v64
    %v66 = vmul.f32 %v44, 0.25
    %v67 = vmul.f32 %v51, 0.25
    %v68 = vmul.f32 %v58, 0.25
    %v69 = vmul.f32 %v65, 0.25
    %v74 = vcombine.low %v66, %v67
    %v75 = vcombine.low %v68, %v69
    %v78 = vsub.f32 %v29, %v74
    %v79 = vsub.f32 %v30, %v75
    %v80 = vmul.f32 %v78, %v78
    %v81 = vmul.f32 %v79, %v79
    %v84 = vcombine.high %v80, %v80
    %v85 = vcombine.high %v81, %v81
    %v88 = vsel %vm37, %v80, 0.0
    %v89 = vrot.slane %v88, 4
    %v90 = vadd.f32 %v88, %v89
    %v91 = vrot.slane %v90, 2
    %v92 = vadd.f32 %v90, %v91
    %v93 = vrot.slane %v92, 1
    %v94 = vadd.f32 %v92, %v93
    %v95 = vsel %vm37, %v84, 0.0
    %v96 = vrot.slane %v95, 4
    %v97 = vadd.f32 %v95, %v96
    %v98 = vrot.slane %v97, 2
    %v99 = vadd.f32 %v97, %v98
    %v100 = vrot.slane %v99, 1
    %v101 = vadd.f32 %v99, %v100
    %v102 = vsel %vm37, %v81, 0.0
    %v103 = vrot.slane %v102, 4
    %v104 = vadd.f32 %v102, %v103
    %v105 = vrot.slane %v104, 2
    %v106 = vadd.f32 %v104, %v105
    %v107 = vrot.slane %v106, 1
    %v108 = vadd.f32 %v106, %v107
    %v109 = vsel %vm37, %v85, 0.0
    %v110 = vrot.slane %v109, 4
    %v111 = vadd.f32 %v109, %v110
    %v112 = vrot.slane %v111, 2
    %v113 = vadd.f32 %v111, %v112
    %v114 = vrot.slane %v113, 1
    %v115 = vadd.f32 %v113, %v114
    %v116 = vmul.f32 %v94, 0.25
    %v117 = vmul.f32 %v101, 0.25
    %v118 = vmul.f32 %v108, 0.25
    %v119 = vmul.f32 %v115, 0.25
    %v120 = vadd.f32 %v116, 1e-06
    %v121 = vadd.f32 %v117, 1e-06
    %v122 = vadd.f32 %v118, 1e-06
    %v123 = vadd.f32 %v119, 1e-06
    %v124 = vrsqrt.pop %v120
    %v125 = vrsqrt.pop %v121
    %v126 = vrsqrt.pop %v122
    %v127 = vrsqrt.pop %v123
    %v128 = vld [vmem:[%s1] sm:$0xf]
    %v129 = vld [vmem:[%s2] sm:$0xf]
    %v134 = vcombine.low %v124, %v125
    %v135 = vcombine.low %v126, %v127
    %v138 = vmul.f32 %v78, %v134
    %v139 = vmul.f32 %v79, %v135
    %141 = vset.pattern.permute.xlu0 0
    %142 = vperm.xlu0 %141, %v128
    %v143 = vpop.permute.xlu0 %142
    %v145 = vunpack.c.l.s4 839922192
    %v146 = vunpack.c.0.s8 %v145
    %v147 = vlaneseq
    %v148 = vshrl.u32 %v147, 7
    %v149 = vsub.s32 %v146, %v148
    %v150 = vrot.slane %v143, %v149
    %v152 = vmul.f32 %v138, %v150
    %v153 = vmul.f32 %v139, %v150
    %155 = vset.pattern.permute.xlu0 0
    %156 = vperm.xlu0 %155, %v129
    %v157 = vpop.permute.xlu0 %156
    %v159 = vunpack.c.l.s4 839922192
    %v160 = vunpack.c.0.s8 %v159
    %v161 = vlaneseq
    %v162 = vshrl.u32 %v161, 7
    %v163 = vsub.s32 %v160, %v162
    %v164 = vrot.slane %v157, %v163
    %v166 = vadd.f32 %v152, %v164
    %v167 = vadd.f32 %v153, %v164
    %168 = vst [vmem:[#allocation5] sm:$0xff] %v166
    %169 = vst [vmem:[#allocation5 + $0x8] sm:$0xff] %v167
    // Predicated region
    $region18: #{tpu_custom_call.1} parent=1 // pred_check
      _
    $region19: #{tpu_custom_call.1} parent=1 // pred_check_branch
      %171 = sbr.rel (0) target = $region21
    $region20: #{tpu_custom_call.1} parent=1 // pred_region
      %s173 = ssub.s32 256, 256
      %174 = vsyncadd [#allocation4], %s173
      %s175 = sshll.u32 [#allocation5], 4
      %s176 = int_to_ptr.vmem [resolvable:$true] %s175
      %181 = dma.vmem_to_hbm [thread:$0]  %s176, 256, %s3, [#allocation4], 128, 128, 8
    $region21: #{tpu_custom_call.1} parent=1 // pred_fallthru
      _
    // Predicated region
    $region22: #{tpu_custom_call.1} parent=1 // pred_check
      _
    $region23: #{tpu_custom_call.1} parent=1 // pred_check_branch
      %183 = sbr.rel (0) target = $region25
    $region24: #{tpu_custom_call.1} parent=1 // pred_region
      %184 = dma.done [#allocation4], 256
    $region25: #{tpu_custom_call.1} parent=1 // pred_fallthru
      _
    %185 = vsyncpa [#allocation3], 1
    %186 = vsyncpa [#allocation4], 1

</llo_original>
